<compile_context>
chip_gen: v5e
topology: v5e:2x2
jax: 0.10.0
libtpu: 0.0.40
codegen_flags: <defaults>
</compile_context>

<pallas_src>
import jax
import jax.numpy as jnp
from jax.experimental import pallas as pl
from jax.experimental.pallas import tpu as pltpu


def critic_kernel(s_ref, a_ref, w1s_ref, w1a_ref, b1_ref, w2_ref, b2_ref,
                  w3_ref, o_ref):
    # Layer 1: split matmul (state / action halves of w1) replaces the
    # concatenated-input matmul; accumulate in f32 on the MXU.
    h1 = (jnp.dot(s_ref[...], w1s_ref[...], preferred_element_type=jnp.float32)
          + jnp.dot(a_ref[...], w1a_ref[...], preferred_element_type=jnp.float32)
          + b1_ref[...].astype(jnp.float32))
    h1 = jnp.maximum(h1, 0.0)                                   # [TM, H]   f32

    # Layer 2: matmul in the weights' dtype (f32 or bf16), f32 accumulate,
    # f32 bias/ReLU on the VPU.
    h2 = (jnp.dot(h1.astype(w2_ref.dtype), w2_ref[...],
                  preferred_element_type=jnp.float32)
          + b2_ref[...].astype(jnp.float32))
    h2 = jnp.maximum(h2, 0.0)                                   # [TM, H//2] f32

    # Layer 3 (output width 1, no bias): VPU multiply + lane reduction instead
    # of pushing a >99%-padded matmul through the MXU.
    w3 = w3_ref[...].astype(jnp.float32)                        # [1, H//2]
    q = jnp.sum(h2 * w3, axis=-1, keepdims=True)                # [TM, 1]
    o_ref[...] = q.astype(o_ref.dtype)


def critic_forward(state, action, params, *, block_batch=256,
                   compute_dtype=jnp.float32):
    """state: [B, S], action: [B, A] -> q: [B, 1]."""
    w1s, w1a, b1, w2, b2, w3 = params
    B, S = state.shape
    A = action.shape[1]
    H = w1s.shape[1]
    H2 = w2.shape[1]

    # Matmul-input dtype (bf16 on v6e/v7x doubles MXU throughput and halves
    # weight/activation DMA bytes); biases stay f32 for the VPU path.
    state = state.astype(compute_dtype)
    action = action.astype(compute_dtype)
    w1s = w1s.astype(compute_dtype)
    w1a = w1a.astype(compute_dtype)
    w2 = w2.astype(compute_dtype)
    w3 = w3.astype(compute_dtype)
    b1 = b1.astype(jnp.float32)
    b2 = b2.astype(jnp.float32)

    # Batch tile: multiple of 8 sublanes; pad B so every grid step is full.
    TM = max(8, min(int(block_batch), pl.next_power_of_2(max(B, 1))))
    TM = -(-TM // 8) * 8
    B_pad = pl.cdiv(B, TM) * TM
    if B_pad != B:
        state = jnp.pad(state, ((0, B_pad - B), (0, 0)))
        action = jnp.pad(action, ((0, B_pad - B), (0, 0)))

    def row_spec(feat):
        return pl.BlockSpec((TM, feat), lambda i: (i, 0))

    def full_spec(r, c):
        return pl.BlockSpec((r, c), lambda i: (0, 0))

    q_pad = pl.pallas_call(
        critic_kernel,
        out_shape=jax.ShapeDtypeStruct((B_pad, 1), jnp.float32),
        grid=(B_pad // TM,),
        in_specs=[
            row_spec(S),            # state tile   [TM, S]
            row_spec(A),            # action tile  [TM, A]
            full_spec(S, H),        # w1_s (resident across the grid)
            full_spec(A, H),        # w1_a
            full_spec(1, H),        # b1
            full_spec(H, H2),       # w2
            full_spec(1, H2),       # b2
            full_spec(1, H2),       # w3 row
        ],
        # TODO(synk): for B in the thousands, write a lane-dense output slab
        # instead of a [B, 1] column to avoid masked partial stores.
        out_specs=pl.BlockSpec((TM, 1), lambda i: (i, 0)),
        compiler_params=pltpu.CompilerParams(
            dimension_semantics=("parallel",),   # shard batch across v7x's 2 TCs
            vmem_limit_bytes=48 * 1024 * 1024,   # headroom under v7x's 64 MiB VMEM
        ),
    )(state, action, w1s, w1a, b1, w2, b2, w3)
    return q_pad[:B]


def init_critic_params(key, state_dim, hidden_size, action_dim, init_w=0.003):
    """Deterministic synthetic init matching Critic.__init__ shapes.

    linear_layer_init: weights ~ U(-init_w, init_w); biases keep PyTorch's
    default Linear init ~ U(-1/sqrt(fan_in), 1/sqrt(fan_in)).
    Weights are stored transposed ([in, out]); w1 is split into state/action
    halves; w3 is stored as a [1, H//2] row (used by the VPU reduction).
    """
    in1 = state_dim + action_dim
    h2 = hidden_size // 2
    k1, k2, k3, kb1, kb2 = jax.random.split(key, 5)
    w1 = jax.random.uniform(k1, (in1, hidden_size), jnp.float32, -init_w, init_w)
    w1s, w1a = w1[:state_dim], w1[state_dim:]
    w2 = jax.random.uniform(k2, (hidden_size, h2), jnp.float32, -init_w, init_w)
    w3 = jax.random.uniform(k3, (1, h2), jnp.float32, -init_w, init_w)
    lim1 = 1.0 / (in1 ** 0.5)
    lim2 = 1.0 / (hidden_size ** 0.5)
    b1 = jax.random.uniform(kb1, (1, hidden_size), jnp.float32, -lim1, lim1)
    b2 = jax.random.uniform(kb2, (1, h2), jnp.float32, -lim2, lim2)
    return (w1s, w1a, b1, w2, b2, w3)


def critic_reference(state, action, params):
    """Pure-JAX f32 reference for correctness checking."""
    w1s, w1a, b1, w2, b2, w3 = params
    x = jnp.concatenate([state, action], axis=1).astype(jnp.float32)
    w1 = jnp.concatenate([w1s, w1a], axis=0)
    h1 = jnp.maximum(x @ w1 + b1, 0.0)
    h2 = jnp.maximum(h1 @ w2 + b2, 0.0)
    return h2 @ w3.T


if __name__ == "__main__":
    batch = 2
    state_dim = 8
    action_dim = 4
    hidden_size = 32

    key = jax.random.PRNGKey(0)
    k_state, k_action, k_params = jax.random.split(key, 3)
    state = jax.random.normal(k_state, (batch, state_dim), jnp.float32)
    action = jax.random.normal(k_action, (batch, action_dim), jnp.float32)
    params = init_critic_params(k_params, state_dim, hidden_size, action_dim)

    # f32 path, single grid point (tight tolerance).
    q = jax.block_until_ready(critic_forward(state, action, params))
    q_ref = critic_reference(state, action, params)
    assert q.shape == (batch, 1), q.shape
    assert jnp.allclose(q, q_ref, atol=1e-5, rtol=1e-5), (q, q_ref)

    # Multi-tile grid + batch-padding path (B not a multiple of the tile).
    kb_s, kb_a = jax.random.split(jax.random.PRNGKey(1))
    state_b = jax.random.normal(kb_s, (40, state_dim), jnp.float32)
    action_b = jax.random.normal(kb_a, (40, action_dim), jnp.float32)
    q_b = jax.block_until_ready(
        critic_forward(state_b, action_b, params, block_batch=16))
    q_b_ref = critic_reference(state_b, action_b, params)
    assert q_b.shape == (40, 1), q_b.shape
    assert jnp.allclose(q_b, q_b_ref, atol=1e-5, rtol=1e-5)

    # bf16 MXU-input path with f32 accumulation (v6e/v7x) — looser tolerance.
    q_bf16 = jax.block_until_ready(
        critic_forward(state, action, params, compute_dtype=jnp.bfloat16))
    assert jnp.allclose(q_bf16, q_ref, atol=1e-2, rtol=5e-2)

    print("KERNEL_OK")
</pallas_src>

<mosaic_0001>
module attributes {stable_mosaic.version = 11 : i64} {
  func.func @critic_kernel(%arg0: i32, %arg1: memref<8x8xf32, #tpu.memory_space<vmem>>, %arg2: memref<8x4xf32, #tpu.memory_space<vmem>>, %arg3: memref<8x32xf32, #tpu.memory_space<vmem>>, %arg4: memref<4x32xf32, #tpu.memory_space<vmem>>, %arg5: memref<1x32xf32, #tpu.memory_space<vmem>>, %arg6: memref<32x16xf32, #tpu.memory_space<vmem>>, %arg7: memref<1x16xf32, #tpu.memory_space<vmem>>, %arg8: memref<1x16xf32, #tpu.memory_space<vmem>>, %arg9: memref<8x1xf32, #tpu.memory_space<vmem>>) attributes {dimension_semantics = [#tpu.dimension_semantics<parallel>], iteration_bounds = array<i64: 1>, scalar_prefetch = 0 : i64, scratch_operands = 0 : i64, tpu.core_type = #tpu.core_type<tc>, window_params = [{transform_indices = @transform_0, window_bounds = array<i64: 8, 8>}, {transform_indices = @transform_1, window_bounds = array<i64: 8, 4>}, {pipeline_mode = #tpu.pipeline_mode<synchronous>, transform_indices = @transform_2, window_bounds = array<i64: 8, 32>}, {pipeline_mode = #tpu.pipeline_mode<synchronous>, transform_indices = @transform_3, window_bounds = array<i64: 4, 32>}, {pipeline_mode = #tpu.pipeline_mode<synchronous>, transform_indices = @transform_4, window_bounds = array<i64: 1, 32>}, {pipeline_mode = #tpu.pipeline_mode<synchronous>, transform_indices = @transform_5, window_bounds = array<i64: 32, 16>}, {pipeline_mode = #tpu.pipeline_mode<synchronous>, transform_indices = @transform_6, window_bounds = array<i64: 1, 16>}, {pipeline_mode = #tpu.pipeline_mode<synchronous>, transform_indices = @transform_7, window_bounds = array<i64: 1, 16>}, {transform_indices = @transform_8, window_bounds = array<i64: 8, 1>}]} {
    %c0 = arith.constant 0 : index
    %c0_0 = arith.constant 0 : index
    %0 = vector.load %arg1[%c0, %c0_0] : memref<8x8xf32, #tpu.memory_space<vmem>>, vector<8x8xf32>
    %c0_1 = arith.constant 0 : index
    %c0_2 = arith.constant 0 : index
    %1 = vector.load %arg3[%c0_1, %c0_2] : memref<8x32xf32, #tpu.memory_space<vmem>>, vector<8x32xf32>
    %cst = arith.constant dense<0.000000e+00> : vector<8x32xf32>
    %2 = tpu.matmul %0, %1, %cst {dimension_numbers = #tpu.dot_dimension_numbers<[1], [0], [0], [1], [0, 0, 1, 1], [], []>} : vector<8x8xf32>, vector<8x32xf32>, vector<8x32xf32> -> vector<8x32xf32>
    %c0_3 = arith.constant 0 : index
    %c0_4 = arith.constant 0 : index
    %3 = vector.load %arg2[%c0_3, %c0_4] : memref<8x4xf32, #tpu.memory_space<vmem>>, vector<8x4xf32>
    %c0_5 = arith.constant 0 : index
    %c0_6 = arith.constant 0 : index
    %4 = vector.load %arg4[%c0_5, %c0_6] : memref<4x32xf32, #tpu.memory_space<vmem>>, vector<4x32xf32>
    %cst_7 = arith.constant dense<0.000000e+00> : vector<8x32xf32>
    %5 = tpu.matmul %3, %4, %cst_7 {dimension_numbers = #tpu.dot_dimension_numbers<[1], [0], [0], [1], [0, 0, 1, 1], [], []>} : vector<8x4xf32>, vector<4x32xf32>, vector<8x32xf32> -> vector<8x32xf32>
    %6 = arith.addf %2, %5 : vector<8x32xf32>
    %c0_8 = arith.constant 0 : index
    %c0_9 = arith.constant 0 : index
    %7 = vector.load %arg5[%c0_8, %c0_9] : memref<1x32xf32, #tpu.memory_space<vmem>>, vector<1x32xf32>
    %8 = vector.broadcast %7 : vector<1x32xf32> to vector<8x32xf32>
    %9 = arith.addf %6, %8 : vector<8x32xf32>
    %cst_10 = arith.constant 0.000000e+00 : f32
    %10 = vector.broadcast %cst_10 : f32 to vector<8x32xf32>
    %11 = arith.maximumf %9, %10 : vector<8x32xf32>
    %c0_11 = arith.constant 0 : index
    %c0_12 = arith.constant 0 : index
    %12 = vector.load %arg6[%c0_11, %c0_12] : memref<32x16xf32, #tpu.memory_space<vmem>>, vector<32x16xf32>
    %cst_13 = arith.constant dense<0.000000e+00> : vector<8x16xf32>
    %13 = tpu.matmul %11, %12, %cst_13 {dimension_numbers = #tpu.dot_dimension_numbers<[1], [0], [0], [1], [0, 0, 1, 1], [], []>} : vector<8x32xf32>, vector<32x16xf32>, vector<8x16xf32> -> vector<8x16xf32>
    %c0_14 = arith.constant 0 : index
    %c0_15 = arith.constant 0 : index
    %14 = vector.load %arg7[%c0_14, %c0_15] : memref<1x16xf32, #tpu.memory_space<vmem>>, vector<1x16xf32>
    %15 = vector.broadcast %14 : vector<1x16xf32> to vector<8x16xf32>
    %16 = arith.addf %13, %15 : vector<8x16xf32>
    %cst_16 = arith.constant 0.000000e+00 : f32
    %17 = vector.broadcast %cst_16 : f32 to vector<8x16xf32>
    %18 = arith.maximumf %16, %17 : vector<8x16xf32>
    %c0_17 = arith.constant 0 : index
    %c0_18 = arith.constant 0 : index
    %19 = vector.load %arg8[%c0_17, %c0_18] : memref<1x16xf32, #tpu.memory_space<vmem>>, vector<1x16xf32>
    %20 = vector.broadcast %19 : vector<1x16xf32> to vector<8x16xf32>
    %21 = arith.mulf %18, %20 : vector<8x16xf32>
    %cst_19 = arith.constant dense<0.000000e+00> : vector<8xf32>
    %22 = vector.multi_reduction <add>, %21, %cst_19 [1] : vector<8x16xf32> to vector<8xf32>
    %23 = vector.shape_cast %22 : vector<8xf32> to vector<8x1xf32>
    %c0_20 = arith.constant 0 : index
    %c0_21 = arith.constant 0 : index
    %24 = vector.load %arg9[%c0_20, %c0_21] : memref<8x1xf32, #tpu.memory_space<vmem>>, vector<8x1xf32>
    tpu.vector_store %arg9[%c0_20, %c0_21], %23 {strides = array<i32>} : memref<8x1xf32, #tpu.memory_space<vmem>>, vector<8x1xf32>,
    return
  }
  func.func @transform_0(%arg0: i32) -> (i32, i32) {
    %c0_i32 = arith.constant 0 : i32
    %c0_i32_0 = arith.constant 0 : i32
    return %arg0, %c0_i32 : i32, i32
  }
  func.func @transform_1(%arg0: i32) -> (i32, i32) {
    %c0_i32 = arith.constant 0 : i32
    %c0_i32_0 = arith.constant 0 : i32
    return %arg0, %c0_i32 : i32, i32
  }
  func.func @transform_2(%arg0: i32) -> (i32, i32) {
    %c0_i32 = arith.constant 0 : i32
    %c0_i32_0 = arith.constant 0 : i32
    %c0_i32_1 = arith.constant 0 : i32
    return %c0_i32, %c0_i32_0 : i32, i32
  }
  func.func @transform_3(%arg0: i32) -> (i32, i32) {
    %c0_i32 = arith.constant 0 : i32
    %c0_i32_0 = arith.constant 0 : i32
    %c0_i32_1 = arith.constant 0 : i32
    return %c0_i32, %c0_i32_0 : i32, i32
  }
  func.func @transform_4(%arg0: i32) -> (i32, i32) {
    %c0_i32 = arith.constant 0 : i32
    %c0_i32_0 = arith.constant 0 : i32
    %c0_i32_1 = arith.constant 0 : i32
    return %c0_i32, %c0_i32_0 : i32, i32
  }
  func.func @transform_5(%arg0: i32) -> (i32, i32) {
    %c0_i32 = arith.constant 0 : i32
    %c0_i32_0 = arith.constant 0 : i32
    %c0_i32_1 = arith.constant 0 : i32
    return %c0_i32, %c0_i32_0 : i32, i32
  }
  func.func @transform_6(%arg0: i32) -> (i32, i32) {
    %c0_i32 = arith.constant 0 : i32
    %c0_i32_0 = arith.constant 0 : i32
    %c0_i32_1 = arith.constant 0 : i32
    return %c0_i32, %c0_i32_0 : i32, i32
  }
  func.func @transform_7(%arg0: i32) -> (i32, i32) {
    %c0_i32 = arith.constant 0 : i32
    %c0_i32_0 = arith.constant 0 : i32
    %c0_i32_1 = arith.constant 0 : i32
    return %c0_i32, %c0_i32_0 : i32, i32
  }
  func.func @transform_8(%arg0: i32) -> (i32, i32) {
    %c0_i32 = arith.constant 0 : i32
    %c0_i32_0 = arith.constant 0 : i32
    return %arg0, %c0_i32 : i32, i32
  }
}

</mosaic_0001>

<llo_original>
// kernel: tpu_custom_call.1
$region0: #{tpu_custom_call.1}
  #allocation0 [shape = 'u32[]', space=smem, size = 0x4, offset = 0x4, fixed_abs, tag = 'smem constant byte address 0x4 - core index']
  #allocation1 [shape = 'u32[72,128]{1,0:T(1,128)}', space=vmem, size = 0x9000, scoped, tag = 'internal scratch']
  %s0 = inlined_call_operand.vmem [shape: f32[8,8], index: 0, kind: input, shape index: {}]
  %s1 = inlined_call_operand.vmem [shape: f32[8,4], index: 1, kind: input, shape index: {}]
  %s2 = inlined_call_operand.vmem [shape: f32[8,32], index: 2, kind: input, shape index: {}]
  %s3 = inlined_call_operand.vmem [shape: f32[4,32], index: 3, kind: input, shape index: {}]
  %s4 = inlined_call_operand.vmem [shape: f32[1,32], index: 4, kind: input, shape index: {}]
  %s5 = inlined_call_operand.vmem [shape: f32[32,16], index: 5, kind: input, shape index: {}]
  %s6 = inlined_call_operand.vmem [shape: f32[1,16], index: 6, kind: input, shape index: {}]
  %s7 = inlined_call_operand.vmem [shape: f32[1,16], index: 7, kind: input, shape index: {}]
  %s8 = inlined_call_operand.vmem [shape: f32[8,1], index: 8, kind: output, shape index: {}]
  %s9 = sld [smem:[#allocation0]]
  $region42: #{tpu_custom_call.1} parent=0
    _
  %s11 = ssub.s32 1, %s9
  %s12 = scalar_select 0, %s11, %s9
  // Predicated region
  $region2: #{tpu_custom_call.1} parent=0 // pred_check
    _
  $region3: #{tpu_custom_call.1} parent=0 // pred_check_branch
    %14 = sbr.rel (0) target = $region5
  $region4: #{tpu_custom_call.1} parent=0 // pred_region
    _
  $region5: #{tpu_custom_call.1} parent=0 // pred_fallthru
    _
  // Predicated region
  $region6: #{tpu_custom_call.1} parent=0 // pred_check
    _
  $region7: #{tpu_custom_call.1} parent=0 // pred_check_branch
    %16 = sbr.rel (0) target = $region9
  $region8: #{tpu_custom_call.1} parent=0 // pred_region
    _
  $region9: #{tpu_custom_call.1} parent=0 // pred_fallthru
    _
  // Predicated region
  $region10: #{tpu_custom_call.1} parent=0 // pred_check
    _
  $region11: #{tpu_custom_call.1} parent=0 // pred_check_branch
    %18 = sbr.rel (0) target = $region13
  $region12: #{tpu_custom_call.1} parent=0 // pred_region
    _
  $region13: #{tpu_custom_call.1} parent=0 // pred_fallthru
    _
  // Predicated region
  $region14: #{tpu_custom_call.1} parent=0 // pred_check
    _
  $region15: #{tpu_custom_call.1} parent=0 // pred_check_branch
    %20 = sbr.rel (0) target = $region17
  $region16: #{tpu_custom_call.1} parent=0 // pred_region
    _
  $region17: #{tpu_custom_call.1} parent=0 // pred_fallthru
    _
  // Predicated region
  $region18: #{tpu_custom_call.1} parent=0 // pred_check
    _
  $region19: #{tpu_custom_call.1} parent=0 // pred_check_branch
    %22 = sbr.rel (0) target = $region21
  $region20: #{tpu_custom_call.1} parent=0 // pred_region
    _
  $region21: #{tpu_custom_call.1} parent=0 // pred_fallthru
    _
  // Predicated region
  $region22: #{tpu_custom_call.1} parent=0 // pred_check
    _
  $region23: #{tpu_custom_call.1} parent=0 // pred_check_branch
    %24 = sbr.rel (0) target = $region25
  $region24: #{tpu_custom_call.1} parent=0 // pred_region
    _
  $region25: #{tpu_custom_call.1} parent=0 // pred_fallthru
    _
  // Predicated region
  $region26: #{tpu_custom_call.1} parent=0 // pred_check
    _
  $region27: #{tpu_custom_call.1} parent=0 // pred_check_branch
    %26 = sbr.rel (0) target = $region29
  $region28: #{tpu_custom_call.1} parent=0 // pred_region
    _
  $region29: #{tpu_custom_call.1} parent=0 // pred_fallthru
    _
  // Predicated region
  $region30: #{tpu_custom_call.1} parent=0 // pred_check
    _
  $region31: #{tpu_custom_call.1} parent=0 // pred_check_branch
    %28 = sbr.rel (0) target = $region33
  $region32: #{tpu_custom_call.1} parent=0 // pred_region
    _
  $region33: #{tpu_custom_call.1} parent=0 // pred_fallthru
    _
  %v29 = vld [vmem:[%s0] sm:$0xff]
  %v30 = vld [vmem:[%s2] sm:$0xff]
  %v31 = vld [vmem:[%s1] sm:$0xff]
  %v32 = vld [vmem:[%s3] sm:$0xf]
  %vm33 = vcmask 31744
  %v35 = vsel %vm33, %v31, 0
  %vm37 = vcmask 1043456
  %v39 = vsel %vm37, %v32, 0
  %41 = vmatpush.msra.mxu0 0.0
  %42 = vmatpush.msra.mxu0 0.0
  %43 = vmatpush.msra.mxu0 0.0
  %44 = vmatpush.msra.mxu0 0.0
  %45 = vmatpush.msra.mxu0 0.0
  %46 = vmatpush.msra.mxu0 0.0
  %47 = vmatpush.msra.mxu0 0.0
  %48 = vmatpush.msra.mxu0 0.0
  %49 = vmatpush.msra.mxu0 0.0
  %50 = vmatpush.msra.mxu0 0.0
  %51 = vmatpush.msra.mxu0 0.0
  %52 = vmatpush.msra.mxu0 0.0
  %53 = vmatpush.msra.mxu0 0.0
  %54 = vmatpush.msra.mxu0 0.0
  %55 = vmatpush.msra.mxu0 0.0
  %56 = vmatpush.msra.mxu0 %v39
  %57 = vmatmul.f32.gmra.mxu0 %v35
  %v58 = vpop.f32.mrf.mxu0
  %v59 = vadd.f32 0.0, %v58
  %60 = vdwg.mxu0
  %vm61 = vcmask 64512
  %v63 = vsel %vm61, %v29, 0
  %65 = vmatpush.msra.mxu0 0.0
  %66 = vmatpush.msra.mxu0 0.0
  %67 = vmatpush.msra.mxu0 0.0
  %68 = vmatpush.msra.mxu0 0.0
  %69 = vmatpush.msra.mxu0 0.0
  %70 = vmatpush.msra.mxu0 0.0
  %71 = vmatpush.msra.mxu0 0.0
  %72 = vmatpush.msra.mxu0 0.0
  %73 = vmatpush.msra.mxu0 0.0
  %74 = vmatpush.msra.mxu0 0.0
  %75 = vmatpush.msra.mxu0 0.0
  %76 = vmatpush.msra.mxu0 0.0
  %77 = vmatpush.msra.mxu0 0.0
  %78 = vmatpush.msra.mxu0 0.0
  %79 = vmatpush.msra.mxu0 0.0
  %80 = vmatpush.msra.mxu0 %v30
  %81 = vmatmul.f32.gmra.mxu0 %v63
  %v82 = vpop.f32.mrf.mxu0
  %v83 = vadd.f32 %v59, %v82
  %84 = vdwg.mxu0
  %v85 = vld [vmem:[%s4] sm:$0x1]
  %v87 = vperm.slane %v85, 0
  %v89 = vadd.f32 %v83, %v87
  %v90 = vmax.f32 %v89, 0.0
  %v91 = vld [vmem:[%s5] sm:$0xff]
  %v92 = vld [vmem:[%s5 + $0x8] sm:$0xff]
  %v93 = vld [vmem:[%s5 + $0x10] sm:$0xff]
  %v94 = vld [vmem:[%s5 + $0x18] sm:$0xff]
  %v95 = vld [vmem:[%s6] sm:$0x1]
  %v97 = vperm.slane %v95, 0
  %vm99 = vcmask 261120
  %v101 = vsel %vm99, %v90, 0
  %103 = vmatpush.msra.mxu0 0.0
  %104 = vmatpush.msra.mxu0 0.0
  %105 = vmatpush.msra.mxu0 0.0
  %106 = vmatpush.msra.mxu0 0.0
  %107 = vmatpush.msra.mxu0 0.0
  %108 = vmatpush.msra.mxu0 0.0
  %109 = vmatpush.msra.mxu0 0.0
  %110 = vmatpush.msra.mxu0 0.0
  %111 = vmatpush.msra.mxu0 0.0
  %112 = vmatpush.msra.mxu0 0.0
  %113 = vmatpush.msra.mxu0 0.0
  %114 = vmatpush.msra.mxu0 0.0
  %115 = vmatpush.msra.mxu0 %v94
  %116 = vmatpush.msra.mxu0 %v93
  %117 = vmatpush.msra.mxu0 %v92
  %118 = vmatpush.msra.mxu0 %v91
  %119 = vmatmul.f32.gmra.mxu0 %v101
  %v120 = vpop.f32.mrf.mxu0
  %v121 = vadd.f32 %v97, %v120
  %122 = vdwg.mxu0
  %v123 = vmax.f32 %v121, 0.0
  %v124 = vld [vmem:[%s7] sm:$0x1]
  %v126 = vperm.slane %v124, 0
  %v128 = vmul.f32 %v123, %v126
  %vm129 = vcmask 130048
  %v130 = vsel %vm129, %v128, 0.0
  %131 = vadd.xlane.f32.xlu0 %v130
  %v132 = vpop.xlane.xlu0 %131
  %vm133 = vcmask 7168
  %134 = vst.msk [vmem:[%s8] sm:$0xff] %vm133, %v132
  // Predicated region
  $region34: #{tpu_custom_call.1} parent=0 // pred_check
    _
  $region35: #{tpu_custom_call.1} parent=0 // pred_check_branch
    %136 = sbr.rel (0) target = $region37
  $region36: #{tpu_custom_call.1} parent=0 // pred_region
    _
  $region37: #{tpu_custom_call.1} parent=0 // pred_fallthru
    _
  // Predicated region
  $region38: #{tpu_custom_call.1} parent=0 // pred_check
    _
  $region39: #{tpu_custom_call.1} parent=0 // pred_check_branch
    %138 = sbr.rel (0) target = $region41
  $region40: #{tpu_custom_call.1} parent=0 // pred_region
    _
  $region41: #{tpu_custom_call.1} parent=0 // pred_fallthru
    _

</llo_original>
